<compile_context>
chip_gen: v5e
topology: v5e:2x2
jax: 0.10.0
libtpu: 0.0.40
codegen_flags: <defaults>
</compile_context>

<pallas_src>
import functools

import jax
import jax.numpy as jnp
from jax.experimental import pallas as pl
from jax.experimental.pallas import tpu as pltpu

ALPHA = 0.25
GAMMA = 2.0
REDUCTION = "mean"  # 'none' | 'mean' | 'sum'


def _round_up(x, m):
    return (x + m - 1) // m * m


def _round_down(x, m):
    return max(m, x // m * m)


def _vmem_capacity_bytes():
    """Physical VMEM per TensorCore; conservative v7x fallback if unknown."""
    try:
        info = pltpu.get_tpu_info()
        cap = getattr(info, "vmem_capacity_bytes", None)
        if cap:
            return int(cap)
    except Exception:
        pass
    return 64 * 1024 * 1024


def _focal_loss_kernel(logits_ref, targets_ref, out_ref, *, n_total, alpha,
                       gamma, reduction):
    # logits_ref : (TILE_N, C) native dtype, VMEM
    # targets_ref: (TILE_N, 1) int32, VMEM
    # out_ref    : reduction == 'none' -> (TILE_N, 1) f32 per-example loss
    #              otherwise          -> (1, 8, 128) f32 lane-dense slab filled
    #                                    with this tile's partial loss sum
    pid = pl.program_id(0)
    logits = logits_ref[...].astype(jnp.float32)              # (TILE_N, C)
    t = targets_ref[...]                                       # (TILE_N, 1)
    tn, c = logits.shape

    # Numerically-stable log-softmax pieces.
    m = jnp.max(logits, axis=1, keepdims=True)                 # (TILE_N, 1)
    s = logits - m                                              # (TILE_N, C)
    e = jnp.exp(s)                                              # (TILE_N, C)
    log_denom = jnp.log(jnp.sum(e, axis=1, keepdims=True))      # (TILE_N, 1)

    # gather(s, 1, targets) fused into a where + lane reduce (VPU/XLU, no MXU,
    # no float one-hot temporary).
    lane = jax.lax.broadcasted_iota(jnp.int32, (tn, c), 1)      # (TILE_N, C)
    s_t = jnp.sum(jnp.where(lane == t, s, 0.0), axis=1, keepdims=True)

    log_pt = s_t - log_denom                                    # (TILE_N, 1)
    pt = jnp.exp(log_pt)                                        # (TILE_N, 1)

    tf = t.astype(jnp.float32)
    # Matches the reference module exactly: alpha*t + (1-alpha)*(1-t) with t
    # being the raw class index cast to float (only truly meaningful for
    # binary {0,1} targets, but kept for fidelity).
    alpha_factor = alpha * tf + (1.0 - alpha) * (1.0 - tf)      # (TILE_N, 1)
    if gamma == 2.0:
        one_minus_pt = 1.0 - pt
        focal_factor = one_minus_pt * one_minus_pt              # explicit square
    else:
        focal_factor = (1.0 - pt) ** gamma
    loss = -alpha_factor * focal_factor * log_pt                # (TILE_N, 1)

    if reduction == "none":
        # Partial last block: Pallas only writes back the in-bounds rows.
        out_ref[...] = loss
    else:
        if n_total % tn == 0:
            tile_sum = jnp.sum(loss)                            # no mask needed
        else:
            # Only reachable when the last tile is partial; use where (NOT a
            # multiply-by-mask) so NaN/Inf from padded garbage rows is dropped.
            row = jax.lax.broadcasted_iota(jnp.int32, (tn, 1), 0) + pid * tn
            tile_sum = jnp.sum(jnp.where(row < n_total, loss, 0.0))
        out_ref[...] = jnp.full((1, 8, 128), tile_sum, dtype=jnp.float32)


def focal_loss(logits, targets, *, alpha=ALPHA, gamma=GAMMA,
               reduction=REDUCTION, tile_n=None):
    """logits: (N, C) float (any dtype); targets: (N,) int class indices."""
    n, c = logits.shape
    targets2d = targets.astype(jnp.int32).reshape(n, 1)

    itemsize = jnp.dtype(logits.dtype).itemsize
    pack = max(8, 32 // itemsize)          # sublane packing: 8 f32 / 16 bf16 / 32 int8

    vmem_cap = _vmem_capacity_bytes()
    # v5e/v6e (128 MiB physical) -> 64 MiB scoped limit; v7x (64 MiB) -> 48 MiB.
    vmem_limit = int(min(64 * 1024 * 1024, (vmem_cap * 3) // 4))

    if tile_n is None:
        # Per-row VMEM footprint:
        #   2 double-buffered logits blocks (native dtype)
        # + ~4 tile-sized f32 intermediates (f32 logits / s / e / where-select)
        # + 2 double-buffered (tile_n, 1) int32 targets blocks, which lane-pad
        #   to (8,128) tiles -> 512 B per row per buffer
        # + the 'none' output blocks (same padding) when applicable.
        per_row = 2 * c * itemsize + 4 * c * 4 + 2 * 512
        if reduction == "none":
            per_row += 2 * 512
        budget = vmem_limit // 2            # headroom for pipeline/compiler use
        tile_n = _round_down(budget // per_row, pack)
        tile_n = max(pack, min(tile_n, 16384, _round_up(n, pack)))
    num_tiles = pl.cdiv(n, tile_n)

    in_specs = [
        pl.BlockSpec((tile_n, c), lambda i: (i, 0)),   # logits tile
        pl.BlockSpec((tile_n, 1), lambda i: (i, 0)),   # targets tile
    ]
    kernel = functools.partial(
        _focal_loss_kernel, n_total=n, alpha=alpha, gamma=gamma,
        reduction=reduction)
    compiler_params = pltpu.CompilerParams(
        dimension_semantics=("parallel",),             # 2-TC sharding on v7x
        vmem_limit_bytes=vmem_limit,
    )
    out_bytes = (n * 4) if reduction == "none" else (num_tiles * 8 * 128 * 4)
    cost = pl.CostEstimate(
        flops=8 * n * c,
        transcendentals=n * c + 3 * n,
        bytes_accessed=n * c * itemsize + n * 4 + out_bytes,
    )

    if reduction == "none":
        out = pl.pallas_call(
            kernel,
            grid=(num_tiles,),
            in_specs=in_specs,
            out_specs=pl.BlockSpec((tile_n, 1), lambda i: (i, 0)),
            out_shape=jax.ShapeDtypeStruct((n, 1), jnp.float32),
            compiler_params=compiler_params,
            cost_estimate=cost,
        )(logits, targets2d)
        return out.reshape(n)

    # 'mean' / 'sum': per-tile partial sums only (no (N,1) HBM writeback).
    partials = pl.pallas_call(
        kernel,
        grid=(num_tiles,),
        in_specs=in_specs,
        out_specs=pl.BlockSpec((1, 8, 128), lambda i: (i, 0, 0)),
        out_shape=jax.ShapeDtypeStruct((num_tiles, 8, 128), jnp.float32),
        compiler_params=compiler_params,
        cost_estimate=cost,
    )(logits, targets2d)
    total = jnp.sum(partials[:, 0, 0])
    if reduction == "mean":
        return total / n        # divide by the *global* N in the wrapper
    return total


def _reference_focal_loss(logits, targets, alpha=ALPHA, gamma=GAMMA,
                          reduction=REDUCTION):
    # Pure-JAX reference mirroring the PyTorch module exactly.
    probs = jax.nn.softmax(logits.astype(jnp.float32), axis=1)
    pt = jnp.take_along_axis(probs, targets[:, None].astype(jnp.int32),
                             axis=1)[:, 0]
    focal = (1.0 - pt) ** gamma
    tf = targets.astype(jnp.float32)
    alpha_factor = alpha * tf + (1.0 - alpha) * (1.0 - tf)
    loss = -alpha_factor * focal * jnp.log(pt + 1e-12)
    if reduction == "mean":
        return loss.mean()
    elif reduction == "sum":
        return loss.sum()
    return loss


if __name__ == "__main__":
    key = jax.random.PRNGKey(0)
    k_logits, k_targets, k_logits2, k_targets2 = jax.random.split(key, 4)

    # Small shapes: batch of 8 examples, 32 classes.
    N, C = 8, 32
    logits = jax.random.normal(k_logits, (N, C), dtype=jnp.float32)
    targets = jax.random.randint(k_targets, (N,), 0, C, dtype=jnp.int32)

    for red in ("mean", "sum", "none"):
        out = jax.block_until_ready(focal_loss(logits, targets, reduction=red))
        ref = _reference_focal_loss(logits, targets, reduction=red)
        assert jnp.allclose(out, ref, rtol=2e-4, atol=1e-3), (red, out, ref)

    # Multi-tile + partial last tile: N=20 with tile_n=8 -> 3 grid steps,
    # exercising the padded-row mask, the partial-sum slab path and the
    # partial output-block writeback for 'none'.
    N2 = 20
    logits2 = jax.random.normal(k_logits2, (N2, C), dtype=jnp.float32)
    targets2 = jax.random.randint(k_targets2, (N2,), 0, C, dtype=jnp.int32)
    for red in ("mean", "none"):
        out2 = jax.block_until_ready(
            focal_loss(logits2, targets2, reduction=red, tile_n=8))
        ref2 = _reference_focal_loss(logits2, targets2, reduction=red)
        assert jnp.allclose(out2, ref2, rtol=2e-4, atol=1e-3), (red, out2, ref2)

    print("KERNEL_OK")
</pallas_src>

<mosaic_0001>
module attributes {stable_mosaic.version = 11 : i64} {
  func.func @_focal_loss_kernel(%arg0: i32, %arg1: memref<8x32xf32, #tpu.memory_space<vmem>>, %arg2: memref<8x1xi32, #tpu.memory_space<vmem>>, %arg3: memref<1x8x128xf32, #tpu.memory_space<vmem>>) attributes {dimension_semantics = [#tpu.dimension_semantics<parallel>], iteration_bounds = array<i64: 1>, scalar_prefetch = 0 : i64, scratch_operands = 0 : i64, tpu.core_type = #tpu.core_type<tc>, window_params = [{transform_indices = @transform_0, window_bounds = array<i64: 8, 32>}, {transform_indices = @transform_1, window_bounds = array<i64: 8, 1>}, {transform_indices = @transform_2, window_bounds = array<i64: 1, 8, 128>}]} {
    %c0 = arith.constant 0 : index
    %c0_0 = arith.constant 0 : index
    %0 = vector.load %arg1[%c0, %c0_0] : memref<8x32xf32, #tpu.memory_space<vmem>>, vector<8x32xf32>
    %c0_1 = arith.constant 0 : index
    %c0_2 = arith.constant 0 : index
    %1 = vector.load %arg2[%c0_1, %c0_2] : memref<8x1xi32, #tpu.memory_space<vmem>>, vector<8x1xi32>
    %cst = arith.constant dense<0xFF800000> : vector<8xf32>
    %2 = vector.multi_reduction <maximumf>, %0, %cst [1] : vector<8x32xf32> to vector<8xf32>
    %3 = vector.shape_cast %2 : vector<8xf32> to vector<8x1xf32>
    %4 = vector.broadcast %3 : vector<8x1xf32> to vector<8x32xf32>
    %5 = arith.subf %0, %4 : vector<8x32xf32>
    %6 = math.exp %5 : vector<8x32xf32>
    %cst_3 = arith.constant dense<0.000000e+00> : vector<8xf32>
    %7 = vector.multi_reduction <add>, %6, %cst_3 [1] : vector<8x32xf32> to vector<8xf32>
    %8 = vector.shape_cast %7 : vector<8xf32> to vector<8x1xf32>
    %9 = math.log %8 : vector<8x1xf32>
    %10 = tpu.iota {dimensions = array<i32: 1>} : vector<8x32xi32>
    %11 = vector.broadcast %1 : vector<8x1xi32> to vector<8x32xi32>
    %12 = arith.cmpi eq, %10, %11 : vector<8x32xi32>
    %cst_4 = arith.constant 0.000000e+00 : f32
    %13 = vector.broadcast %cst_4 : f32 to vector<8x32xf32>
    %14 = arith.select %12, %5, %13 : vector<8x32xi1>, vector<8x32xf32>
    %cst_5 = arith.constant dense<0.000000e+00> : vector<8xf32>
    %15 = vector.multi_reduction <add>, %14, %cst_5 [1] : vector<8x32xf32> to vector<8xf32>
    %16 = vector.shape_cast %15 : vector<8xf32> to vector<8x1xf32>
    %17 = arith.subf %16, %9 : vector<8x1xf32>
    %18 = math.exp %17 : vector<8x1xf32>
    %19 = arith.sitofp %1 : vector<8x1xi32> to vector<8x1xf32>
    %cst_6 = arith.constant 2.500000e-01 : f32
    %20 = vector.broadcast %cst_6 : f32 to vector<8x1xf32>
    %21 = arith.mulf %20, %19 : vector<8x1xf32>
    %cst_7 = arith.constant 1.000000e+00 : f32
    %22 = vector.broadcast %cst_7 : f32 to vector<8x1xf32>
    %23 = arith.subf %22, %19 : vector<8x1xf32>
    %cst_8 = arith.constant 7.500000e-01 : f32
    %24 = vector.broadcast %cst_8 : f32 to vector<8x1xf32>
    %25 = arith.mulf %24, %23 : vector<8x1xf32>
    %26 = arith.addf %21, %25 : vector<8x1xf32>
    %cst_9 = arith.constant 1.000000e+00 : f32
    %27 = vector.broadcast %cst_9 : f32 to vector<8x1xf32>
    %28 = arith.subf %27, %18 : vector<8x1xf32>
    %29 = arith.mulf %28, %28 : vector<8x1xf32>
    %cst_10 = arith.constant 0.000000e+00 : f32
    %30 = vector.broadcast %cst_10 : f32 to vector<8x1xf32>
    %31 = arith.subf %30, %26 : vector<8x1xf32>
    %32 = arith.mulf %31, %29 : vector<8x1xf32>
    %33 = arith.mulf %32, %17 : vector<8x1xf32>
    %34 = vector.shape_cast %33 : vector<8x1xf32> to vector<1x8x1xf32>
    %cst_11 = arith.constant dense<0.000000e+00> : vector<1xf32>
    %35 = vector.multi_reduction <add>, %34, %cst_11 [1, 2] : vector<1x8x1xf32> to vector<1xf32>
    %36 = vector.shape_cast %35 : vector<1xf32> to vector<1x1x1xf32>
    %37 = vector.extract %36[0, 0, 0] : f32 from vector<1x1x1xf32>
    %38 = vector.broadcast %37 : f32 to vector<1x8x128xf32>
    %c0_12 = arith.constant 0 : index
    %c0_13 = arith.constant 0 : index
    %c0_14 = arith.constant 0 : index
    %39 = vector.load %arg3[%c0_12, %c0_13, %c0_14] : memref<1x8x128xf32, #tpu.memory_space<vmem>>, vector<1x8x128xf32>
    tpu.vector_store %arg3[%c0_12, %c0_13, %c0_14], %38 {strides = array<i32>} : memref<1x8x128xf32, #tpu.memory_space<vmem>>, vector<1x8x128xf32>,
    return
  }
  func.func @transform_0(%arg0: i32) -> (i32, i32) {
    %c0_i32 = arith.constant 0 : i32
    %c0_i32_0 = arith.constant 0 : i32
    return %arg0, %c0_i32 : i32, i32
  }
  func.func @transform_1(%arg0: i32) -> (i32, i32) {
    %c0_i32 = arith.constant 0 : i32
    %c0_i32_0 = arith.constant 0 : i32
    return %arg0, %c0_i32 : i32, i32
  }
  func.func @transform_2(%arg0: i32) -> (i32, i32, i32) {
    %c0_i32 = arith.constant 0 : i32
    %c0_i32_0 = arith.constant 0 : i32
    %c0_i32_1 = arith.constant 0 : i32
    return %arg0, %c0_i32, %c0_i32_0 : i32, i32, i32
  }
}

</mosaic_0001>

<llo_original>
// kernel: tpu_custom_call.1
$region0: #{tpu_custom_call.1}
  #allocation0 [shape = 'u32[]', space=smem, size = 0x4, offset = 0x4, fixed_abs, tag = 'smem constant byte address 0x4 - core index']
  #allocation1 [shape = 'u32[72,128]{1,0:T(1,128)}', space=vmem, size = 0x9000, scoped, tag = 'internal scratch']
  %s0 = inlined_call_operand.vmem [shape: f32[8,32], index: 0, kind: input, shape index: {}]
  %s1 = inlined_call_operand.vmem [shape: s32[8,1], index: 1, kind: input, shape index: {}]
  %s2 = inlined_call_operand.hbm [shape: f32[1,8,128], index: 2, kind: output, shape index: {}]
  %s3 = sld [smem:[#allocation0]]
  $region18: #{tpu_custom_call.1} parent=0
    _
  %s5 = ssub.s32 1, %s3
  %s6 = scalar_select 0, %s5, %s3
  $region1: #{tpu_custom_call.1} parent=0
    #allocation2 [shape = 'u8[4096]{0}', space=vmem, size = 0x1000, scoped, tag = 'output window, operand 0, single buffered']
    #allocation3 [shape = 's32[1]{0}', space=sflag, size = 0x4, scoped, tag = 'scoped memory for tpu_custom_call.1']
    %7 = vsyncpa [#allocation3], 0
    // Predicated region
    $region2: #{tpu_custom_call.1} parent=1 // pred_check
      _
    $region3: #{tpu_custom_call.1} parent=1 // pred_check_branch
      %9 = sbr.rel (0) target = $region5
    $region4: #{tpu_custom_call.1} parent=1 // pred_region
      _
    $region5: #{tpu_custom_call.1} parent=1 // pred_fallthru
      _
    // Predicated region
    $region6: #{tpu_custom_call.1} parent=1 // pred_check
      _
    $region7: #{tpu_custom_call.1} parent=1 // pred_check_branch
      %11 = sbr.rel (0) target = $region9
    $region8: #{tpu_custom_call.1} parent=1 // pred_region
      _
    $region9: #{tpu_custom_call.1} parent=1 // pred_fallthru
      _
    %v12 = vld [vmem:[%s0] sm:$0xff]
    %v13 = vld [vmem:[%s1] sm:$0xff]
    %vm14 = vcmask 261120
    %v15 = vsel %vm14, %v12, -inf
    %16 = vmax.xlane.f32.xlu0 %v15
    %v17 = vpop.xlane.xlu0 %16
    %v18 = vsub.f32 %v12, %v17
    %v19 = vmul.f32 %v18, 1.442695
    %v20 = vpow.pop %v19
    %v21 = vsel %vm14, %v20, 0.0
    %22 = vadd.xlane.f32.xlu0 %v21
    %v23 = vpop.xlane.xlu0 %22
    %v24 = vlog2.pop %v23
    %v25 = vmul.f32 %v24, 0.6931472
    %v26 = vlaneseq
    %v27 = vand.u32 %v26, 127
    %28 = vset.pattern.permute.xlu0 0
    %29 = vperm.xlu0 %28, %v13
    %v30 = vpop.permute.xlu0 %29
    %vm31 = vcmp.eq.s32.totalorder %v27, %v30
    %v32 = vsel %vm31, %v18, 0.0
    %v33 = vsel %vm14, %v32, 0.0
    %34 = vadd.xlane.f32.xlu0 %v33
    %v35 = vpop.xlane.xlu0 %34
    %v36 = vsub.f32 %v35, %v25
    %v37 = vmul.f32 %v36, 1.442695
    %v38 = vpow.pop %v37
    %v39 = vcvt.s32.f32 %v13
    %v40 = vmul.f32 %v39, 0.25
    %v41 = vsub.f32 1.0, %v39
    %v42 = vmul.f32 %v41, 0.75
    %v43 = vadd.f32 %v40, %v42
    %v44 = vsub.f32 1.0, %v38
    %v45 = vmul.f32 %v44, %v44
    %v46 = vsub.f32 0.0, %v43
    %v47 = vmul.f32 %v46, %v45
    %v48 = vmul.f32 %v47, %v36
    %vm49 = vcmask 7168
    %v50 = vsel %vm49, %v48, 0.0
    %51 = vadd.xlane.f32.xlu0 %v50
    %v52 = vpop.xlane.xlu0 %51
    %v53 = vrot.slane %v52, 4
    %v54 = vadd.f32 %v52, %v53
    %v55 = vrot.slane %v54, 2
    %v56 = vadd.f32 %v54, %v55
    %v57 = vrot.slane %v56, 1
    %v58 = vadd.f32 %v56, %v57
    %s59 = vtos %v58
    %v60 = vstv %s59
    %61 = vst [vmem:[#allocation2] sm:$0xff] %v60
    // Predicated region
    $region10: #{tpu_custom_call.1} parent=1 // pred_check
      _
    $region11: #{tpu_custom_call.1} parent=1 // pred_check_branch
      %63 = sbr.rel (0) target = $region13
    $region12: #{tpu_custom_call.1} parent=1 // pred_region
      %65 = vsyncadd [#allocation3], 0
      %s67 = sshll.u32 [#allocation2], 4
      %s68 = int_to_ptr.vmem [resolvable:$true] %s67
      %s69 = sshll.u32 %s2, 4
      %s70 = int_to_ptr.hbm [resolvable:$true] %s69
      %72 = dma.vmem_to_hbm [thread:$0]  %s68, 128, %s70, [#allocation3]
    $region13: #{tpu_custom_call.1} parent=1 // pred_fallthru
      _
    // Predicated region
    $region14: #{tpu_custom_call.1} parent=1 // pred_check
      _
    $region15: #{tpu_custom_call.1} parent=1 // pred_check_branch
      %74 = sbr.rel (0) target = $region17
    $region16: #{tpu_custom_call.1} parent=1 // pred_region
      %76 = dma.done [#allocation3], 128
    $region17: #{tpu_custom_call.1} parent=1 // pred_fallthru
      _
    %77 = vsyncpa [#allocation3], 1

</llo_original>
